<compile_context>
chip_gen: v7x
topology: tpu7x:2x2x1
jax: 0.10.0
libtpu: 0.0.40
codegen_flags: <defaults>
</compile_context>

<pallas_src>
import functools

import jax
import jax.numpy as jnp
from jax.experimental import pallas as pl
from jax.experimental.pallas import tpu as pltpu


def _round_up(x, m):
    return (x + m - 1) // m * m


def _decoder_kernel(x_ref, w1_ref, b1_ref, w2_ref, b2_ref, out_ref, *, valid_m):
    # ---- Linear 1: bf16 MXU inputs, f32 accumulate; f32 epilogue ----
    h = jnp.dot(x_ref[...], w1_ref[...], preferred_element_type=jnp.float32)
    h = jnp.maximum(h + b1_ref[...], 0.0)          # bias broadcast (1,H)->(TB,H), f32

    # ---- Linear 2: lane-dense padded output (last dim multiple of 128) ----
    y = jnp.dot(h.astype(jnp.bfloat16), w2_ref[...],
                preferred_element_type=jnp.float32)
    y = y + b2_ref[...]

    # ---- MinMaxNorm(0, 5) along the last dim, ignoring padded lanes ----
    mp = y.shape[-1]
    if valid_m < mp:
        lane = jax.lax.broadcasted_iota(jnp.int32, y.shape, dimension=1)
        valid = lane < valid_m
        y_for_min = jnp.where(valid, y, jnp.float32(jnp.inf))
        y_for_max = jnp.where(valid, y, jnp.float32(-jnp.inf))
    else:
        y_for_min = y
        y_for_max = y

    y_min = jnp.min(y_for_min, axis=-1, keepdims=True)
    y_max = jnp.max(y_for_max, axis=-1, keepdims=True)

    # divide -> EUP approx reciprocal; fold the *5 into the scale.
    inv = pl.reciprocal(y_max - y_min + 1e-8, approx=True)
    out_ref[...] = ((y - y_min) * (5.0 * inv)).astype(out_ref.dtype)


def prepare_decoder_params(w1, b1, w2, b2):
    """One-time param prep: pad the item dim to a multiple of 128 (lane-dense),
    cast matmul weights to bf16, keep biases f32 for the f32 epilogue."""
    H, M = w2.shape
    Mp = _round_up(M, 128)
    w2p = jnp.zeros((H, Mp), jnp.float32).at[:, :M].set(w2)
    b2p = jnp.zeros((1, Mp), jnp.float32).at[:, :M].set(b2.reshape(1, M))
    return (w1.astype(jnp.bfloat16),
            b1.reshape(1, -1).astype(jnp.float32),
            w2p.astype(jnp.bfloat16),
            b2p,
            M)


def rating_reconstruct_decoder(a_m_u, w1_bf, b1, w2_bf, b2, valid_m, *,
                               batch_tile=128):
    """a_m_u: (B, num_aspects, embedding_aspect) f32.
    w1_bf: (F, H) bf16, b1: (1, H) f32, w2_bf: (H, Mp) bf16, b2: (1, Mp) f32,
    with Mp a multiple of 128 (from prepare_decoder_params)."""
    B = a_m_u.shape[0]
    x = a_m_u.reshape(B, -1).astype(jnp.bfloat16)   # flatten + halve x DMA
    F = x.shape[1]
    H = w1_bf.shape[1]
    Mp = w2_bf.shape[1]

    # Sublane-friendly batch tile: at least 8 rows, at most `batch_tile`.
    TB = min(batch_tile, _round_up(B, 8))
    Bp = _round_up(B, TB)
    if Bp != B:
        x = jnp.pad(x, ((0, Bp - B), (0, 0)))
    grid = (Bp // TB,)

    kernel = functools.partial(_decoder_kernel, valid_m=valid_m)

    out = pl.pallas_call(
        kernel,
        out_shape=jax.ShapeDtypeStruct((Bp, Mp), jnp.float32),
        grid=grid,
        in_specs=[
            pl.BlockSpec((TB, F), lambda i: (i, 0)),   # x tiles stream per step
            pl.BlockSpec((F, H), lambda i: (0, 0)),    # weights stay resident
            pl.BlockSpec((1, H), lambda i: (0, 0)),
            pl.BlockSpec((H, Mp), lambda i: (0, 0)),
            pl.BlockSpec((1, Mp), lambda i: (0, 0)),
        ],
        out_specs=pl.BlockSpec((TB, Mp), lambda i: (i, 0)),
        compiler_params=pltpu.CompilerParams(
            dimension_semantics=("parallel",),         # shards across v7x's 2 TCs
        ),
    )(x, w1_bf, b1, w2_bf, b2)

    return out[:B, :valid_m]


def _reference_matched(a_m_u, w1_bf, b1, w2_bf, b2, valid_m):
    """Plain-JAX reference with the same dtype casts the kernel uses
    (bf16 matmul inputs, f32 accumulate/epilogue, exact division)."""
    B = a_m_u.shape[0]
    x = a_m_u.reshape(B, -1).astype(jnp.bfloat16)
    h = jnp.dot(x, w1_bf, preferred_element_type=jnp.float32) + b1
    h = jnp.maximum(h, 0.0)
    y = jnp.dot(h.astype(jnp.bfloat16), w2_bf, preferred_element_type=jnp.float32) + b2
    y = y[:, :valid_m]
    y_min = jnp.min(y, axis=-1, keepdims=True)
    y_max = jnp.max(y, axis=-1, keepdims=True)
    return (y - y_min) / (y_max - y_min + 1e-8) * 5.0


if __name__ == "__main__":
    # Small shapes consistent with the module's forward:
    #   batch=2, num_aspects=4, embedding_aspect=32 -> F=128, hidden=128, max_items=16
    B, num_aspects, embedding_aspect = 2, 4, 32
    F = num_aspects * embedding_aspect
    H = 128
    M = 16

    key = jax.random.PRNGKey(0)
    k_x, k_w1, k_b1, k_w2, k_b2 = jax.random.split(key, 5)

    a_m_u = jax.random.normal(k_x, (B, num_aspects, embedding_aspect), dtype=jnp.float32)

    # "Linear" parameters stored as (in, out) so the kernel does x @ W.
    w1 = jax.random.normal(k_w1, (F, H), dtype=jnp.float32) * (1.0 / jnp.sqrt(F))
    b1 = jax.random.normal(k_b1, (1, H), dtype=jnp.float32) * 0.01
    w2 = jax.random.normal(k_w2, (H, M), dtype=jnp.float32) * (1.0 / jnp.sqrt(H))
    b2 = jax.random.normal(k_b2, (1, M), dtype=jnp.float32) * 0.01

    w1p, b1p, w2p, b2p, valid_m = prepare_decoder_params(w1, b1, w2, b2)

    out = rating_reconstruct_decoder(a_m_u, w1p, b1p, w2p, b2p, valid_m)
    out = jax.block_until_ready(out)
    assert out.shape == (B, M), out.shape

    # Numerics-matched reference (bf16 weights/activations are the intended,
    # review-recommended storage format; exact f32 module math differs only by
    # that quantization).  Tolerance covers the EUP approx reciprocal as well.
    ref = _reference_matched(a_m_u, w1p, b1p, w2p, b2p, valid_m)
    max_err = float(jnp.max(jnp.abs(out - ref)))
    assert jnp.allclose(out, ref, atol=2e-2, rtol=2e-2), max_err

    print("KERNEL_OK")
</pallas_src>

<mosaic_0001>
module attributes {stable_mosaic.version = 11 : i64} {
  func.func @_decoder_kernel(%arg0: i32, %arg1: memref<8x128xbf16, #tpu.memory_space<vmem>>, %arg2: memref<128x128xbf16, #tpu.memory_space<vmem>>, %arg3: memref<1x128xf32, #tpu.memory_space<vmem>>, %arg4: memref<128x128xbf16, #tpu.memory_space<vmem>>, %arg5: memref<1x128xf32, #tpu.memory_space<vmem>>, %arg6: memref<8x128xf32, #tpu.memory_space<vmem>>) attributes {dimension_semantics = [#tpu.dimension_semantics<parallel>], iteration_bounds = array<i64: 1>, scalar_prefetch = 0 : i64, scratch_operands = 0 : i64, tpu.core_type = #tpu.core_type<tc>, window_params = [{transform_indices = @transform_0, window_bounds = array<i64: 8, 128>}, {pipeline_mode = #tpu.pipeline_mode<synchronous>, transform_indices = @transform_1, window_bounds = array<i64: 128, 128>}, {pipeline_mode = #tpu.pipeline_mode<synchronous>, transform_indices = @transform_2, window_bounds = array<i64: 1, 128>}, {pipeline_mode = #tpu.pipeline_mode<synchronous>, transform_indices = @transform_3, window_bounds = array<i64: 128, 128>}, {pipeline_mode = #tpu.pipeline_mode<synchronous>, transform_indices = @transform_4, window_bounds = array<i64: 1, 128>}, {transform_indices = @transform_5, window_bounds = array<i64: 8, 128>}]} {
    %c0 = arith.constant 0 : index
    %c0_0 = arith.constant 0 : index
    %0 = vector.load %arg1[%c0, %c0_0] : memref<8x128xbf16, #tpu.memory_space<vmem>>, vector<8x128xbf16>
    %c0_1 = arith.constant 0 : index
    %c0_2 = arith.constant 0 : index
    %1 = vector.load %arg2[%c0_1, %c0_2] : memref<128x128xbf16, #tpu.memory_space<vmem>>, vector<128x128xbf16>
    %cst = arith.constant dense<0.000000e+00> : vector<8x128xf32>
    %2 = tpu.matmul %0, %1, %cst {dimension_numbers = #tpu.dot_dimension_numbers<[1], [0], [0], [1], [0, 0, 1, 1], [], []>} : vector<8x128xbf16>, vector<128x128xbf16>, vector<8x128xf32> -> vector<8x128xf32>
    %c0_3 = arith.constant 0 : index
    %c0_4 = arith.constant 0 : index
    %3 = vector.load %arg3[%c0_3, %c0_4] : memref<1x128xf32, #tpu.memory_space<vmem>>, vector<1x128xf32>
    %4 = vector.broadcast %3 : vector<1x128xf32> to vector<8x128xf32>
    %5 = arith.addf %2, %4 : vector<8x128xf32>
    %cst_5 = arith.constant 0.000000e+00 : f32
    %6 = vector.broadcast %cst_5 : f32 to vector<8x128xf32>
    %7 = arith.maximumf %5, %6 : vector<8x128xf32>
    %8 = arith.truncf %7 : vector<8x128xf32> to vector<8x128xbf16>
    %c0_6 = arith.constant 0 : index
    %c0_7 = arith.constant 0 : index
    %9 = vector.load %arg4[%c0_6, %c0_7] : memref<128x128xbf16, #tpu.memory_space<vmem>>, vector<128x128xbf16>
    %cst_8 = arith.constant dense<0.000000e+00> : vector<8x128xf32>
    %10 = tpu.matmul %8, %9, %cst_8 {dimension_numbers = #tpu.dot_dimension_numbers<[1], [0], [0], [1], [0, 0, 1, 1], [], []>} : vector<8x128xbf16>, vector<128x128xbf16>, vector<8x128xf32> -> vector<8x128xf32>
    %c0_9 = arith.constant 0 : index
    %c0_10 = arith.constant 0 : index
    %11 = vector.load %arg5[%c0_9, %c0_10] : memref<1x128xf32, #tpu.memory_space<vmem>>, vector<1x128xf32>
    %12 = vector.broadcast %11 : vector<1x128xf32> to vector<8x128xf32>
    %13 = arith.addf %10, %12 : vector<8x128xf32>
    %14 = tpu.iota {dimensions = array<i32: 1>} : vector<8x128xi32>
    %c16_i32 = arith.constant 16 : i32
    %15 = vector.broadcast %c16_i32 : i32 to vector<8x128xi32>
    %16 = arith.cmpi slt, %14, %15 : vector<8x128xi32>
    %cst_11 = arith.constant 0x7F800000 : f32
    %17 = vector.broadcast %cst_11 : f32 to vector<8x128xf32>
    %18 = arith.select %16, %13, %17 : vector<8x128xi1>, vector<8x128xf32>
    %cst_12 = arith.constant 0xFF800000 : f32
    %19 = vector.broadcast %cst_12 : f32 to vector<8x128xf32>
    %20 = arith.select %16, %13, %19 : vector<8x128xi1>, vector<8x128xf32>
    %cst_13 = arith.constant dense<0x7F800000> : vector<8xf32>
    %21 = vector.multi_reduction <minimumf>, %18, %cst_13 [1] : vector<8x128xf32> to vector<8xf32>
    %22 = vector.shape_cast %21 : vector<8xf32> to vector<8x1xf32>
    %cst_14 = arith.constant dense<0xFF800000> : vector<8xf32>
    %23 = vector.multi_reduction <maximumf>, %20, %cst_14 [1] : vector<8x128xf32> to vector<8xf32>
    %24 = vector.shape_cast %23 : vector<8xf32> to vector<8x1xf32>
    %25 = arith.subf %24, %22 : vector<8x1xf32>
    %cst_15 = arith.constant 9.99999993E-9 : f32
    %26 = vector.broadcast %cst_15 : f32 to vector<8x1xf32>
    %27 = arith.addf %25, %26 : vector<8x1xf32>
    %28 = tpu.reciprocal %27 {approx = true} : vector<8x1xf32> -> vector<8x1xf32>
    %29 = vector.broadcast %22 : vector<8x1xf32> to vector<8x128xf32>
    %30 = arith.subf %13, %29 : vector<8x128xf32>
    %cst_16 = arith.constant 5.000000e+00 : f32
    %31 = vector.broadcast %cst_16 : f32 to vector<8x1xf32>
    %32 = arith.mulf %31, %28 : vector<8x1xf32>
    %33 = vector.broadcast %32 : vector<8x1xf32> to vector<8x128xf32>
    %34 = arith.mulf %30, %33 : vector<8x128xf32>
    %c0_17 = arith.constant 0 : index
    %c0_18 = arith.constant 0 : index
    %35 = vector.load %arg6[%c0_17, %c0_18] : memref<8x128xf32, #tpu.memory_space<vmem>>, vector<8x128xf32>
    tpu.vector_store %arg6[%c0_17, %c0_18], %34 {strides = array<i32>} : memref<8x128xf32, #tpu.memory_space<vmem>>, vector<8x128xf32>,
    return
  }
  func.func @transform_0(%arg0: i32) -> (i32, i32) {
    %c0_i32 = arith.constant 0 : i32
    %c0_i32_0 = arith.constant 0 : i32
    return %arg0, %c0_i32 : i32, i32
  }
  func.func @transform_1(%arg0: i32) -> (i32, i32) {
    %c0_i32 = arith.constant 0 : i32
    %c0_i32_0 = arith.constant 0 : i32
    %c0_i32_1 = arith.constant 0 : i32
    return %c0_i32, %c0_i32_0 : i32, i32
  }
  func.func @transform_2(%arg0: i32) -> (i32, i32) {
    %c0_i32 = arith.constant 0 : i32
    %c0_i32_0 = arith.constant 0 : i32
    %c0_i32_1 = arith.constant 0 : i32
    return %c0_i32, %c0_i32_0 : i32, i32
  }
  func.func @transform_3(%arg0: i32) -> (i32, i32) {
    %c0_i32 = arith.constant 0 : i32
    %c0_i32_0 = arith.constant 0 : i32
    %c0_i32_1 = arith.constant 0 : i32
    return %c0_i32, %c0_i32_0 : i32, i32
  }
  func.func @transform_4(%arg0: i32) -> (i32, i32) {
    %c0_i32 = arith.constant 0 : i32
    %c0_i32_0 = arith.constant 0 : i32
    %c0_i32_1 = arith.constant 0 : i32
    return %c0_i32, %c0_i32_0 : i32, i32
  }
  func.func @transform_5(%arg0: i32) -> (i32, i32) {
    %c0_i32 = arith.constant 0 : i32
    %c0_i32_0 = arith.constant 0 : i32
    return %arg0, %c0_i32 : i32, i32
  }
}

</mosaic_0001>

<llo_original>
// kernel: tpu_custom_call.1
$region0: #{tpu_custom_call.1}
  #allocation0 [shape = 'u32[]', space=smem, size = 0x4, offset = 0x4, fixed_abs, tag = 'smem constant byte address 0x4 - core index']
  #allocation1 [shape = 'u32[144,128]{1,0:T(1,128)}', space=vmem, size = 0x12000, scoped, tag = 'internal scratch']
  %s0 = inlined_call_operand.hbm [shape: bf16[8,128], index: 0, kind: input, shape index: {}]
  %s1 = inlined_call_operand.hbm [shape: bf16[128,128], index: 1, kind: input, shape index: {}]
  %s2 = inlined_call_operand.vmem [shape: f32[1,128], index: 2, kind: input, shape index: {}]
  %s3 = inlined_call_operand.hbm [shape: bf16[128,128], index: 3, kind: input, shape index: {}]
  %s4 = inlined_call_operand.vmem [shape: f32[1,128], index: 4, kind: input, shape index: {}]
  %s5 = inlined_call_operand.hbm [shape: f32[8,128], index: 5, kind: output, shape index: {}]
  %s6 = sld [smem:[#allocation0]]
  $region42: #{tpu_custom_call.1} parent=0
    _
  %s8 = ssub.s32 1, %s6
  %s9 = scalar_select 0, %s8, %s6
  $region1: #{tpu_custom_call.1} parent=0
    #allocation2 [shape = 'u8[2048]{0}', space=vmem, size = 0x800, scoped, tag = 'input window, operand 0, single buffered']
    #allocation3 [shape = 's32[1]{0}', space=sflag, size = 0x4, scoped, tag = 'scoped memory for tpu_custom_call.1']
    #allocation4 [shape = 's32[1]{0}', space=sflag, size = 0x4, scoped, tag = 'scoped memory for tpu_custom_call.1']
    #allocation5 [shape = 'u8[32768]{0}', space=vmem, size = 0x8000, scoped, tag = 'input window, operand 1, single buffered']
    #allocation6 [shape = 's32[1]{0}', space=sflag, size = 0x4, scoped, tag = 'scoped memory for tpu_custom_call.1']
    #allocation7 [shape = 'u8[32768]{0}', space=vmem, size = 0x8000, scoped, tag = 'input window, operand 3, single buffered']
    #allocation8 [shape = 'u8[4096]{0}', space=vmem, size = 0x1000, scoped, tag = 'output window, operand 0, single buffered']
    %10 = vsyncpa [#allocation3], 0
    %11 = vsyncpa [#allocation6], 0
    %12 = vsyncpa [#allocation4], 0
    // Predicated region
    $region2: #{tpu_custom_call.1} parent=1 // pred_check
      _
    $region3: #{tpu_custom_call.1} parent=1 // pred_check_branch
      %14 = sbr.rel (0) target = $region5
    $region4: #{tpu_custom_call.1} parent=1 // pred_region
      %s16 = ssub.s32 64, 64
      %17 = vsyncadd [#allocation3], %s16
      %s19 = sshll.u32 [#allocation2], 4
      %s20 = int_to_ptr.vmem [resolvable:$true] %s19
      %22 = dma.hbm_to_vmem [thread:$0]  %s0, 64, %s20, [#allocation3]
    $region5: #{tpu_custom_call.1} parent=1 // pred_fallthru
      _
    // Predicated region
    $region6: #{tpu_custom_call.1} parent=1 // pred_check
      _
    $region7: #{tpu_custom_call.1} parent=1 // pred_check_branch
      %24 = sbr.rel (0) target = $region9
    $region8: #{tpu_custom_call.1} parent=1 // pred_region
      %s26 = ssub.s32 1024, 1024
      %27 = vsyncadd [#allocation6], %s26
      %s28 = sshll.u32 [#allocation5], 4
      %s29 = int_to_ptr.vmem [resolvable:$true] %s28
      %34 = dma.hbm_to_vmem [thread:$0]  %s1, 1024, %s29, [#allocation6], 64, 64, 4
    $region9: #{tpu_custom_call.1} parent=1 // pred_fallthru
      _
    // Predicated region
    $region10: #{tpu_custom_call.1} parent=1 // pred_check
      _
    $region11: #{tpu_custom_call.1} parent=1 // pred_check_branch
      %36 = sbr.rel (0) target = $region13
    $region12: #{tpu_custom_call.1} parent=1 // pred_region
      _
    $region13: #{tpu_custom_call.1} parent=1 // pred_fallthru
      _
    // Predicated region
    $region14: #{tpu_custom_call.1} parent=1 // pred_check
      _
    $region15: #{tpu_custom_call.1} parent=1 // pred_check_branch
      %38 = sbr.rel (0) target = $region17
    $region16: #{tpu_custom_call.1} parent=1 // pred_region
      %s40 = ssub.s32 1024, 1024
      %41 = vsyncadd [#allocation6], %s40
      %s42 = sshll.u32 [#allocation7], 4
      %s43 = int_to_ptr.vmem [resolvable:$true] %s42
      %48 = dma.hbm_to_vmem [thread:$0]  %s3, 1024, %s43, [#allocation6], 64, 64, 4
    $region17: #{tpu_custom_call.1} parent=1 // pred_fallthru
      _
    // Predicated region
    $region18: #{tpu_custom_call.1} parent=1 // pred_check
      _
    $region19: #{tpu_custom_call.1} parent=1 // pred_check_branch
      %50 = sbr.rel (0) target = $region21
    $region20: #{tpu_custom_call.1} parent=1 // pred_region
      _
    $region21: #{tpu_custom_call.1} parent=1 // pred_fallthru
      _
    // Predicated region
    $region22: #{tpu_custom_call.1} parent=1 // pred_check
      _
    $region23: #{tpu_custom_call.1} parent=1 // pred_check_branch
      %52 = sbr.rel (0) target = $region25
    $region24: #{tpu_custom_call.1} parent=1 // pred_region
      %53 = dma.done [#allocation3], 64
    $region25: #{tpu_custom_call.1} parent=1 // pred_fallthru
      _
    // Predicated region
    $region26: #{tpu_custom_call.1} parent=1 // pred_check
      _
    $region27: #{tpu_custom_call.1} parent=1 // pred_check_branch
      %55 = sbr.rel (0) target = $region29
    $region28: #{tpu_custom_call.1} parent=1 // pred_region
      %56 = dma.done [#allocation6], 1024
    $region29: #{tpu_custom_call.1} parent=1 // pred_fallthru
      _
    // Predicated region
    $region30: #{tpu_custom_call.1} parent=1 // pred_check
      _
    $region31: #{tpu_custom_call.1} parent=1 // pred_check_branch
      %58 = sbr.rel (0) target = $region33
    $region32: #{tpu_custom_call.1} parent=1 // pred_region
      %59 = dma.done [#allocation6], 1024
    $region33: #{tpu_custom_call.1} parent=1 // pred_fallthru
      _
    %v61 = vld [vmem:[#allocation2] sm:$0xf]
    %v62 = vld [vmem:[#allocation5] sm:$0xf]
    %v63 = vld [vmem:[#allocation5 + $0x4] sm:$0xf]
    %v64 = vld [vmem:[#allocation5 + $0x8] sm:$0xf]
    %v65 = vld [vmem:[#allocation5 + $0xc] sm:$0xf]
    %v66 = vld [vmem:[#allocation5 + $0x10] sm:$0xf]
    %v67 = vld [vmem:[#allocation5 + $0x14] sm:$0xf]
    %v68 = vld [vmem:[#allocation5 + $0x18] sm:$0xf]
    %v69 = vld [vmem:[#allocation5 + $0x1c] sm:$0xf]
    %v70 = vld [vmem:[#allocation5 + $0x20] sm:$0xf]
    %v71 = vld [vmem:[#allocation5 + $0x24] sm:$0xf]
    %v72 = vld [vmem:[#allocation5 + $0x28] sm:$0xf]
    %v73 = vld [vmem:[#allocation5 + $0x2c] sm:$0xf]
    %v74 = vld [vmem:[#allocation5 + $0x30] sm:$0xf]
    %v75 = vld [vmem:[#allocation5 + $0x34] sm:$0xf]
    %v76 = vld [vmem:[#allocation5 + $0x38] sm:$0xf]
    %v77 = vld [vmem:[#allocation5 + $0x3c] sm:$0xf]
    %v78 = vld [vmem:[%s2] sm:$0x1]
    %v80 = vlaneseq
    %v81 = vshrl.u32 %v80, 7
    %v82 = vsub.s32 0, %v81
    %v83 = vrot.slane %v78, %v82
    %v101 = vunpack.c.l.b16 %v62
    %v102 = vunpack.c.l.b16 %v63
    %v103 = vunpack.c.l.b16 %v64
    %v104 = vunpack.c.l.b16 %v65
    %v105 = vunpack.c.l.b16 %v66
    %v106 = vunpack.c.l.b16 %v67
    %v107 = vunpack.c.l.b16 %v68
    %v108 = vunpack.c.l.b16 %v69
    %v109 = vunpack.c.l.b16 %v70
    %v110 = vunpack.c.l.b16 %v71
    %v111 = vunpack.c.l.b16 %v72
    %v112 = vunpack.c.l.b16 %v73
    %v113 = vunpack.c.l.b16 %v74
    %v114 = vunpack.c.l.b16 %v75
    %v115 = vunpack.c.l.b16 %v76
    %v116 = vunpack.c.l.b16 %v77
    %v117 = vpack.c.b16 %v102, %v101
    %v118 = vpack.c.b16 %v104, %v103
    %v119 = vpack.c.b16 %v106, %v105
    %v120 = vpack.c.b16 %v108, %v107
    %v121 = vpack.c.b16 %v110, %v109
    %v122 = vpack.c.b16 %v112, %v111
    %v123 = vpack.c.b16 %v114, %v113
    %v124 = vpack.c.b16 %v116, %v115
    %133 = vmatprep.subr.bf16.mxu0 0
    %134 = vmatpush1.bf16.msra.mxu0 %v117
    %135 = vmatprep.subr.bf16.mxu0 0
    %136 = vmatpush1.bf16.msra.mxu0 %v118
    %137 = vmatprep.subr.bf16.mxu0 0
    %138 = vmatpush1.bf16.msra.mxu0 %v119
    %139 = vmatprep.subr.bf16.mxu0 0
    %140 = vmatpush1.bf16.msra.mxu0 %v120
    %141 = vmatprep.subr.bf16.mxu0 0
    %142 = vmatpush1.bf16.msra.mxu0 %v121
    %143 = vmatprep.subr.bf16.mxu0 0
    %144 = vmatpush1.bf16.msra.mxu0 %v122
    %145 = vmatprep.subr.bf16.mxu0 0
    %146 = vmatpush1.bf16.msra.mxu0 %v123
    %147 = vmatprep.subr.bf16.mxu0 0
    %148 = vmatpush1.bf16.msra.mxu0 %v124
    %149 = vmatprep.subr.bf16.mxu0 0
    %150 = vmatpush1.bf16.msra.mxu0 0
    %151 = vmatprep.subr.bf16.mxu0 0
    %152 = vmatpush1.bf16.msra.mxu0 0
    %153 = vmatprep.subr.bf16.mxu0 0
    %154 = vmatpush1.bf16.msra.mxu0 0
    %155 = vmatprep.subr.bf16.mxu0 0
    %156 = vmatpush1.bf16.msra.mxu0 0
    %157 = vmatprep.subr.bf16.mxu0 0
    %158 = vmatpush1.bf16.msra.mxu0 0
    %159 = vmatprep.subr.bf16.mxu0 0
    %160 = vmatpush1.bf16.msra.mxu0 0
    %161 = vmatprep.subr.bf16.mxu0 0
    %162 = vmatpush1.bf16.msra.mxu0 0
    %163 = vmatprep.subr.bf16.mxu0 0
    %164 = vmatpush1.bf16.msra.mxu0 0
    %165 = vmatprep.mubr.bf16.mxu0 0
    %166 = vmatmul.mubr.bf16.gmra.mrb[0].mxu0 %v61
    %v167 = vpop.f32.mrb[0].mxu0
    %v168 = vadd.f32 %v83, %v167
    %v169 = vpop.f32.mrb[0].mxu0
    %v170 = vpop.f32.mrb[0].mxu0
    %v171 = vpop.f32.mrb[0].mxu0
    %172 = vdwg.mxu0
    %v173 = vmax.f32 %v168, 0.0
    %v174 = vpack.c.bf16 %v173, %v173
    %v175 = vld [vmem:[#allocation7] sm:$0xf]
    %v176 = vld [vmem:[#allocation7 + $0x4] sm:$0xf]
    %v177 = vld [vmem:[#allocation7 + $0x8] sm:$0xf]
    %v178 = vld [vmem:[#allocation7 + $0xc] sm:$0xf]
    %v179 = vld [vmem:[#allocation7 + $0x10] sm:$0xf]
    %v180 = vld [vmem:[#allocation7 + $0x14] sm:$0xf]
    %v181 = vld [vmem:[#allocation7 + $0x18] sm:$0xf]
    %v182 = vld [vmem:[#allocation7 + $0x1c] sm:$0xf]
    %v183 = vld [vmem:[#allocation7 + $0x20] sm:$0xf]
    %v184 = vld [vmem:[#allocation7 + $0x24] sm:$0xf]
    %v185 = vld [vmem:[#allocation7 + $0x28] sm:$0xf]
    %v186 = vld [vmem:[#allocation7 + $0x2c] sm:$0xf]
    %v187 = vld [vmem:[#allocation7 + $0x30] sm:$0xf]
    %v188 = vld [vmem:[#allocation7 + $0x34] sm:$0xf]
    %v189 = vld [vmem:[#allocation7 + $0x38] sm:$0xf]
    %v190 = vld [vmem:[#allocation7 + $0x3c] sm:$0xf]
    %v191 = vld [vmem:[%s4] sm:$0x1]
    %v193 = vlaneseq
    %v194 = vshrl.u32 %v193, 7
    %v195 = vsub.s32 0, %v194
    %v196 = vrot.slane %v191, %v195
    %v214 = vunpack.c.l.b16 %v175
    %v215 = vunpack.c.l.b16 %v176
    %v216 = vunpack.c.l.b16 %v177
    %v217 = vunpack.c.l.b16 %v178
    %v218 = vunpack.c.l.b16 %v179
    %v219 = vunpack.c.l.b16 %v180
    %v220 = vunpack.c.l.b16 %v181
    %v221 = vunpack.c.l.b16 %v182
    %v222 = vunpack.c.l.b16 %v183
    %v223 = vunpack.c.l.b16 %v184
    %v224 = vunpack.c.l.b16 %v185
    %v225 = vunpack.c.l.b16 %v186
    %v226 = vunpack.c.l.b16 %v187
    %v227 = vunpack.c.l.b16 %v188
    %v228 = vunpack.c.l.b16 %v189
    %v229 = vunpack.c.l.b16 %v190
    %v230 = vpack.c.b16 %v215, %v214
    %v231 = vpack.c.b16 %v217, %v216
    %v232 = vpack.c.b16 %v219, %v218
    %v233 = vpack.c.b16 %v221, %v220
    %v234 = vpack.c.b16 %v223, %v222
    %v235 = vpack.c.b16 %v225, %v224
    %v236 = vpack.c.b16 %v227, %v226
    %v237 = vpack.c.b16 %v229, %v228
    %246 = vmatprep.subr.bf16.mxu0 0
    %247 = vmatpush1.bf16.msra.mxu0 %v230
    %248 = vmatprep.subr.bf16.mxu0 0
    %249 = vmatpush1.bf16.msra.mxu0 %v231
    %250 = vmatprep.subr.bf16.mxu0 0
    %251 = vmatpush1.bf16.msra.mxu0 %v232
    %252 = vmatprep.subr.bf16.mxu0 0
    %253 = vmatpush1.bf16.msra.mxu0 %v233
    %254 = vmatprep.subr.bf16.mxu0 0
    %255 = vmatpush1.bf16.msra.mxu0 %v234
    %256 = vmatprep.subr.bf16.mxu0 0
    %257 = vmatpush1.bf16.msra.mxu0 %v235
    %258 = vmatprep.subr.bf16.mxu0 0
    %259 = vmatpush1.bf16.msra.mxu0 %v236
    %260 = vmatprep.subr.bf16.mxu0 0
    %261 = vmatpush1.bf16.msra.mxu0 %v237
    %262 = vmatprep.subr.bf16.mxu0 0
    %263 = vmatpush1.bf16.msra.mxu0 0
    %264 = vmatprep.subr.bf16.mxu0 0
    %265 = vmatpush1.bf16.msra.mxu0 0
    %266 = vmatprep.subr.bf16.mxu0 0
    %267 = vmatpush1.bf16.msra.mxu0 0
    %268 = vmatprep.subr.bf16.mxu0 0
    %269 = vmatpush1.bf16.msra.mxu0 0
    %270 = vmatprep.subr.bf16.mxu0 0
    %271 = vmatpush1.bf16.msra.mxu0 0
    %272 = vmatprep.subr.bf16.mxu0 0
    %273 = vmatpush1.bf16.msra.mxu0 0
    %274 = vmatprep.subr.bf16.mxu0 0
    %275 = vmatpush1.bf16.msra.mxu0 0
    %276 = vmatprep.subr.bf16.mxu0 0
    %277 = vmatpush1.bf16.msra.mxu0 0
    %278 = vmatprep.mubr.bf16.mxu0 0
    %279 = vmatmul.mubr.bf16.gmra.mrb[0].mxu0 %v174
    %v280 = vpop.f32.mrb[0].mxu0
    %v281 = vadd.f32 %v196, %v280
    %v282 = vpop.f32.mrb[0].mxu0
    %v283 = vpop.f32.mrb[0].mxu0
    %v284 = vpop.f32.mrb[0].mxu0
    %285 = vdwg.mxu0
    %v286 = vlaneseq
    %v287 = vand.u32 %v286, 127
    %vm288 = vcmp.lt.s32.totalorder %v287, 16
    %v289 = vsel %vm288, %v281, inf
    %v290 = vsel %vm288, %v281, -inf
    %291 = vmin.xlane.f32.xlu0 %v289
    %v292 = vpop.xlane.xlu0 %291
    %293 = vmax.xlane.f32.xlu0 %v290
    %v294 = vpop.xlane.xlu0 %293
    %v295 = vsub.f32 %v294, %v292
    %v296 = vadd.f32 %v295, 1e-08
    %v297 = vrcp.pop %v296
    %v298 = vsub.f32 %v281, %v292
    %v299 = vmul.f32 %v297, 5.0
    %v300 = vmul.f32 %v298, %v299
    %301 = vst [vmem:[#allocation8] sm:$0xff] %v300
    // Predicated region
    $region34: #{tpu_custom_call.1} parent=1 // pred_check
      _
    $region35: #{tpu_custom_call.1} parent=1 // pred_check_branch
      %303 = sbr.rel (0) target = $region37
    $region36: #{tpu_custom_call.1} parent=1 // pred_region
      %s305 = ssub.s32 128, 128
      %306 = vsyncadd [#allocation4], %s305
      %s308 = sshll.u32 [#allocation8], 4
      %s309 = int_to_ptr.vmem [resolvable:$true] %s308
      %311 = dma.vmem_to_hbm [thread:$0]  %s309, 128, %s5, [#allocation4]
    $region37: #{tpu_custom_call.1} parent=1 // pred_fallthru
      _
    // Predicated region
    $region38: #{tpu_custom_call.1} parent=1 // pred_check
      _
    $region39: #{tpu_custom_call.1} parent=1 // pred_check_branch
      %313 = sbr.rel (0) target = $region41
    $region40: #{tpu_custom_call.1} parent=1 // pred_region
      %314 = dma.done [#allocation4], 128
    $region41: #{tpu_custom_call.1} parent=1 // pred_fallthru
      _
    %315 = vsyncpa [#allocation3], 1
    %316 = vsyncpa [#allocation6], 1
    %317 = vsyncpa [#allocation4], 1

</llo_original>
